<compile_context>
chip_gen: v7x
topology: tpu7x:2x2x1
jax: 0.10.0
libtpu: 0.0.40
codegen_flags: <defaults>
</compile_context>

<pallas_src>
import functools
import math

import jax
import jax.numpy as jnp
from jax.experimental import pallas as pl
from jax.experimental.pallas import tpu as pltpu

_EPS = 1e-6  # torch.nn.functional.pairwise_distance default eps


def _contrastive_kernel(out1_ref, refs_t_ref, cr_ref, w_ref, label_ref,
                        loss_ref, *, marg):
    o = out1_ref[...]                                            # (Bt, D) f32/bf16
    # MXU: dots[b, k] = <output1[b, :], refs[k, :]>
    dots = jnp.dot(o, refs_t_ref[...],
                   preferred_element_type=jnp.float32)           # (Bt, N+1)
    o32 = o.astype(jnp.float32)
    o_sq = jnp.sum(o32 * o32, axis=-1, keepdims=True)            # (Bt, 1)
    o_rs = jnp.sum(o32, axis=-1, keepdims=True)                  # (Bt, 1)
    # ||o - r + eps||^2 via expansion; cr holds ||r||^2 - 2*eps*sum(r) + D*eps^2.
    sq = o_sq + (2.0 * _EPS) * o_rs - 2.0 * dots + cr_ref[...]   # (Bt, N+1)
    dists = jnp.sqrt(jnp.maximum(sq, 0.0))                       # EUP sqrt
    # w = (scale, ..., scale, alpha*scale); weighted lane-reduce over the N+1 refs.
    euclid = jnp.sum(dists * w_ref[...], axis=-1, keepdims=True)  # (Bt, 1)
    lab = label_ref[...]                                         # (Bt, 1)
    hinge = jnp.maximum(jnp.float32(0.0), marg - euclid)
    loss_ref[...] = ((1.0 - lab) * euclid * euclid
                     + lab * hinge * hinge) * 0.5


def contrastive_loss(output1, vectors, anchor, label, *,
                     alpha, margin=0.8, v=0.0, block_b=512):
    """output1: (B, D) or (D,); vectors: (N, D); anchor: (1, D); label: scalar or (B,).

    Returns the per-sample loss of shape (B,) (B == 1 matches the PyTorch (1,) output)."""
    output1 = jnp.asarray(output1)
    if output1.dtype != jnp.bfloat16:          # keep bf16 streams bf16; else f32
        output1 = output1.astype(jnp.float32)
    if output1.ndim == 1:
        output1 = output1[None, :]
    b, d = output1.shape

    vectors = jnp.asarray(vectors)
    anchor = jnp.asarray(anchor).reshape(1, -1)
    n = vectors.shape[0]
    assert vectors.shape[1] == d and anchor.shape[1] == d

    # refs-derived constants, computed once in f32 (tiny) and reused by every tile.
    refs32 = jnp.concatenate(
        [vectors.astype(jnp.float32), anchor.astype(jnp.float32)], axis=0)   # (N+1, D)
    refs_t = refs32.astype(output1.dtype).T                                  # (D, N+1)
    cr = (jnp.sum(refs32 * refs32, axis=1)
          - (2.0 * _EPS) * jnp.sum(refs32, axis=1)
          + d * _EPS * _EPS).reshape(1, n + 1).astype(jnp.float32)

    # Fold 1/sqrt(D) (and the optional 1/v) into the per-row weights.
    scale = 1.0 / math.sqrt(float(d))
    if v > 0.0:
        scale = scale / float(v)
    w = jnp.full((1, n + 1), scale, jnp.float32).at[0, n].set(float(alpha) * scale)
    marg = (n + float(alpha)) * float(margin)

    label = jnp.broadcast_to(
        jnp.asarray(label, jnp.float32).reshape(-1), (b,)).reshape(b, 1)

    kernel = functools.partial(_contrastive_kernel, marg=float(marg))

    # Cap block_b so the double-buffered output1 stream stays under ~24 MiB
    # (safe for v5e/v6e default scoped VMEM and for v7x's 64 MiB physical VMEM).
    bytes_per_row = d * output1.dtype.itemsize
    max_rows = (24 * 1024 * 1024) // max(1, 2 * bytes_per_row)
    block_b = max(8, (min(block_b, max_rows) // 8) * 8)

    vmem_limit = 32 * 1024 * 1024

    if b <= block_b:
        # Whole batch in one shot: no grid, no pipelining-step overhead.
        loss = pl.pallas_call(
            kernel,
            out_shape=jax.ShapeDtypeStruct((b, 1), jnp.float32),
            in_specs=[pl.BlockSpec(memory_space=pltpu.MemorySpace.VMEM)] * 5,
            out_specs=pl.BlockSpec(memory_space=pltpu.MemorySpace.VMEM),
            compiler_params=pltpu.CompilerParams(vmem_limit_bytes=vmem_limit),
        )(output1, refs_t, cr, w, label)
        return loss.reshape(b)

    # Large batch: tile the batch axis.  No padding copy — the trailing partial
    # block is handled by Pallas boundary masking.  "parallel" lets v7x shard the
    # >= 2 batch tiles across both TensorCores.
    num_tiles = -(-b // block_b)
    loss = pl.pallas_call(
        kernel,
        out_shape=jax.ShapeDtypeStruct((b, 1), jnp.float32),
        grid=(num_tiles,),
        in_specs=[
            pl.BlockSpec((block_b, d), lambda i: (i, 0)),   # output1 batch tile
            pl.BlockSpec((d, n + 1), lambda i: (0, 0)),     # refs^T (constant block)
            pl.BlockSpec((1, n + 1), lambda i: (0, 0)),     # ||r||^2 / eps constants
            pl.BlockSpec((1, n + 1), lambda i: (0, 0)),     # per-row weights
            pl.BlockSpec((block_b, 1), lambda i: (i, 0)),   # labels
        ],
        out_specs=pl.BlockSpec((block_b, 1), lambda i: (i, 0)),
        compiler_params=pltpu.CompilerParams(
            dimension_semantics=("parallel",),
            vmem_limit_bytes=vmem_limit),
    )(output1, refs_t, cr, w, label)
    return loss.reshape(b)


def _reference_loss(output1, vectors, anchor, label, *, alpha, margin=0.8, v=0.0):
    # Pure-JAX re-statement of the PyTorch forward (vectorized over batch).
    output1 = jnp.asarray(output1, jnp.float32)
    vectors = jnp.asarray(vectors, jnp.float32)
    anchor = jnp.asarray(anchor, jnp.float32).reshape(1, -1)
    label = jnp.asarray(label, jnp.float32).reshape(-1)
    d = output1.shape[-1]
    sd = jnp.sqrt(jnp.float32(d))
    dist = jnp.sum(
        jnp.sqrt(jnp.sum((output1[:, None, :] - vectors[None, :, :] + _EPS) ** 2,
                         axis=-1)), axis=-1) / sd
    dist = dist + alpha * (jnp.sqrt(jnp.sum((output1 - anchor + _EPS) ** 2, axis=-1)) / sd)
    if v > 0.0:
        dist = dist / v
    marg = (vectors.shape[0] + alpha) * margin
    return ((1 - label) * dist ** 2 * 0.5
            + label * jnp.maximum(0.0, marg - dist) ** 2 * 0.5)


if __name__ == "__main__":
    key = jax.random.PRNGKey(0)
    k1, k2, k3, k4, k5 = jax.random.split(key, 5)

    D = 32    # embedding dim
    N = 8     # number of contrast vectors
    alpha = 0.5
    margin = 0.8

    vectors = jax.random.normal(k2, (N, D), dtype=jnp.float32)
    anchor = jax.random.normal(k3, (1, D), dtype=jnp.float32)   # module's fixed anchor

    # 1) original module shape: single training instance (B = 1), both label values.
    out1_single = jax.random.normal(k1, (1, D), dtype=jnp.float32)
    for lab in (0.0, 1.0):
        got = contrastive_loss(out1_single, vectors, anchor, lab,
                               alpha=alpha, margin=margin, v=0.0)
        jax.block_until_ready(got)
        want = _reference_loss(out1_single, vectors, anchor, lab,
                               alpha=alpha, margin=margin, v=0.0)
        assert got.shape == (1,)
        assert jnp.allclose(got, want, rtol=1e-4, atol=1e-4), (lab, got, want)

    # 2) small batch (no-grid path), mixed labels.
    B = 8
    out1_b = jax.random.normal(k4, (B, D), dtype=jnp.float32)
    label_b = (jnp.arange(B) % 2).astype(jnp.float32)
    got = contrastive_loss(out1_b, vectors, anchor, label_b,
                           alpha=alpha, margin=margin, v=0.0)
    jax.block_until_ready(got)
    want = _reference_loss(out1_b, vectors, anchor, label_b,
                           alpha=alpha, margin=margin, v=0.0)
    assert jnp.allclose(got, want, rtol=1e-4, atol=1e-4), (got, want)

    # 2b) bf16 embeddings stay bf16 on the HBM stream (MXU consumes them directly).
    got_bf16 = contrastive_loss(out1_b.astype(jnp.bfloat16),
                                vectors.astype(jnp.bfloat16),
                                anchor.astype(jnp.bfloat16), label_b,
                                alpha=alpha, margin=margin, v=0.0)
    jax.block_until_ready(got_bf16)
    assert jnp.allclose(got_bf16, want, rtol=2e-2, atol=1e-2), (got_bf16, want)

    # 3) larger batch -> tiled path with a partial trailing block (no padding copy),
    #    >= 2 "parallel" batch tiles, and v > 0.
    B2 = 600
    out1_big = jax.random.normal(k5, (B2, D), dtype=jnp.float32)
    label_big = (jnp.arange(B2) % 2).astype(jnp.float32)
    got = contrastive_loss(out1_big, vectors, anchor, label_big,
                           alpha=alpha, margin=margin, v=0.5, block_b=512)
    jax.block_until_ready(got)
    want = _reference_loss(out1_big, vectors, anchor, label_big,
                           alpha=alpha, margin=margin, v=0.5)
    assert got.shape == (B2,)
    assert jnp.allclose(got, want, rtol=1e-4, atol=1e-4), (got, want)

    print("KERNEL_OK")
</pallas_src>

<mosaic_0001>
module attributes {stable_mosaic.version = 11 : i64} {
  func.func @_contrastive_kernel(%arg0: memref<1x32xf32, #tpu.memory_space<vmem>>, %arg1: memref<32x9xf32, #tpu.memory_space<vmem>>, %arg2: memref<1x9xf32, #tpu.memory_space<vmem>>, %arg3: memref<1x9xf32, #tpu.memory_space<vmem>>, %arg4: memref<1x1xf32, #tpu.memory_space<vmem>>, %arg5: memref<1x1xf32, #tpu.memory_space<vmem>>) attributes {dimension_semantics = [], scalar_prefetch = 0 : i64, scratch_operands = 0 : i64, tpu.core_type = #tpu.core_type<tc>} {
    %c0 = arith.constant 0 : index
    %c0_0 = arith.constant 0 : index
    %0 = vector.load %arg0[%c0, %c0_0] : memref<1x32xf32, #tpu.memory_space<vmem>>, vector<1x32xf32>
    %c0_1 = arith.constant 0 : index
    %c0_2 = arith.constant 0 : index
    %1 = vector.load %arg1[%c0_1, %c0_2] : memref<32x9xf32, #tpu.memory_space<vmem>>, vector<32x9xf32>
    %cst = arith.constant dense<0.000000e+00> : vector<1x9xf32>
    %2 = tpu.matmul %0, %1, %cst {dimension_numbers = #tpu.dot_dimension_numbers<[1], [0], [0], [1], [0, 0, 1, 1], [], []>} : vector<1x32xf32>, vector<32x9xf32>, vector<1x9xf32> -> vector<1x9xf32>
    %3 = arith.mulf %0, %0 : vector<1x32xf32>
    %cst_3 = arith.constant dense<0.000000e+00> : vector<1xf32>
    %4 = vector.multi_reduction <add>, %3, %cst_3 [1] : vector<1x32xf32> to vector<1xf32>
    %5 = vector.shape_cast %4 : vector<1xf32> to vector<1x1xf32>
    %cst_4 = arith.constant dense<0.000000e+00> : vector<1xf32>
    %6 = vector.multi_reduction <add>, %0, %cst_4 [1] : vector<1x32xf32> to vector<1xf32>
    %7 = vector.shape_cast %6 : vector<1xf32> to vector<1x1xf32>
    %cst_5 = arith.constant 2.000000e-06 : f32
    %8 = vector.broadcast %cst_5 : f32 to vector<1x1xf32>
    %9 = arith.mulf %8, %7 : vector<1x1xf32>
    %10 = arith.addf %5, %9 : vector<1x1xf32>
    %cst_6 = arith.constant 2.000000e+00 : f32
    %11 = vector.broadcast %cst_6 : f32 to vector<1x9xf32>
    %12 = arith.mulf %11, %2 : vector<1x9xf32>
    %13 = vector.broadcast %10 : vector<1x1xf32> to vector<1x9xf32>
    %14 = arith.subf %13, %12 : vector<1x9xf32>
    %c0_7 = arith.constant 0 : index
    %c0_8 = arith.constant 0 : index
    %15 = vector.load %arg2[%c0_7, %c0_8] : memref<1x9xf32, #tpu.memory_space<vmem>>, vector<1x9xf32>
    %16 = arith.addf %14, %15 : vector<1x9xf32>
    %cst_9 = arith.constant 0.000000e+00 : f32
    %17 = vector.broadcast %cst_9 : f32 to vector<1x9xf32>
    %18 = arith.maximumf %16, %17 : vector<1x9xf32>
    %19 = math.sqrt %18 : vector<1x9xf32>
    %c0_10 = arith.constant 0 : index
    %c0_11 = arith.constant 0 : index
    %20 = vector.load %arg3[%c0_10, %c0_11] : memref<1x9xf32, #tpu.memory_space<vmem>>, vector<1x9xf32>
    %21 = arith.mulf %19, %20 : vector<1x9xf32>
    %cst_12 = arith.constant dense<0.000000e+00> : vector<1xf32>
    %22 = vector.multi_reduction <add>, %21, %cst_12 [1] : vector<1x9xf32> to vector<1xf32>
    %23 = vector.shape_cast %22 : vector<1xf32> to vector<1x1xf32>
    %c0_13 = arith.constant 0 : index
    %c0_14 = arith.constant 0 : index
    %24 = vector.load %arg4[%c0_13, %c0_14] : memref<1x1xf32, #tpu.memory_space<vmem>>, vector<1x1xf32>
    %cst_15 = arith.constant 6.800000e+00 : f32
    %25 = vector.broadcast %cst_15 : f32 to vector<1x1xf32>
    %26 = arith.subf %25, %23 : vector<1x1xf32>
    %cst_16 = arith.constant 0.000000e+00 : f32
    %27 = vector.broadcast %cst_16 : f32 to vector<1x1xf32>
    %28 = arith.maximumf %27, %26 : vector<1x1xf32>
    %cst_17 = arith.constant 1.000000e+00 : f32
    %29 = vector.broadcast %cst_17 : f32 to vector<1x1xf32>
    %30 = arith.subf %29, %24 : vector<1x1xf32>
    %31 = arith.mulf %30, %23 : vector<1x1xf32>
    %32 = arith.mulf %31, %23 : vector<1x1xf32>
    %33 = arith.mulf %24, %28 : vector<1x1xf32>
    %34 = arith.mulf %33, %28 : vector<1x1xf32>
    %35 = arith.addf %32, %34 : vector<1x1xf32>
    %cst_18 = arith.constant 5.000000e-01 : f32
    %36 = vector.broadcast %cst_18 : f32 to vector<1x1xf32>
    %37 = arith.mulf %35, %36 : vector<1x1xf32>
    %c0_19 = arith.constant 0 : index
    %c0_20 = arith.constant 0 : index
    %38 = vector.load %arg5[%c0_19, %c0_20] : memref<1x1xf32, #tpu.memory_space<vmem>>, vector<1x1xf32>
    tpu.vector_store %arg5[%c0_19, %c0_20], %37 {strides = array<i32>} : memref<1x1xf32, #tpu.memory_space<vmem>>, vector<1x1xf32>,
    return
  }
}

</mosaic_0001>

<llo_original>
// kernel: tpu_custom_call.1
$region0: #{tpu_custom_call.1}
  #allocation0 [shape = 'u32[]', space=smem, size = 0x4, offset = 0x4, fixed_abs, tag = 'smem constant byte address 0x4 - core index']
  #allocation1 [shape = 'u32[144,128]{1,0:T(1,128)}', space=vmem, size = 0x12000, scoped, tag = 'internal scratch']
  #allocation2 [shape = 'f32[1,1]{1,0:T(1,128)S(1)}', space=vmem, size = 0x200, scoped, tag = 'scoped memory for tpu_custom_call.1']
  %s0 = inlined_call_operand.vmem [shape: f32[1,32], index: 0, kind: input, shape index: {}]
  %s1 = inlined_call_operand.vmem [shape: f32[32,9], index: 1, kind: input, shape index: {}]
  %s2 = inlined_call_operand.vmem [shape: f32[1,9], index: 2, kind: input, shape index: {}]
  %s3 = inlined_call_operand.vmem [shape: f32[1,9], index: 3, kind: input, shape index: {}]
  %s4 = inlined_call_operand.<no memory space> [shape: f32[1,1], index: 4, kind: input, shape index: {}]
  %s5 = inlined_call_operand.hbm [shape: f32[1,1], index: 5, kind: output, shape index: {}]
  %s6 = sld [smem:[#allocation0]]
  $region30: #{tpu_custom_call.1} parent=0
    _
  %s8 = ssub.s32 1, %s6
  %s9 = scalar_select 0, %s8, %s6
  %v10 = vstv %s4
  %11 = vst [vmem:[#allocation2] sm:$0x1] %v10
  $region1: #{tpu_custom_call.1} parent=0
    #allocation3 [shape = 'u8[512]{0}', space=vmem, size = 0x400, scoped, tag = 'output window, operand 0, single buffered']
    #allocation4 [shape = 's32[1]{0}', space=sflag, size = 0x4, scoped, tag = 'scoped memory for tpu_custom_call.1']
    %12 = vsyncpa [#allocation4], 0
    // Predicated region
    $region2: #{tpu_custom_call.1} parent=1 // pred_check
      _
    $region3: #{tpu_custom_call.1} parent=1 // pred_check_branch
      %14 = sbr.rel (0) target = $region5
    $region4: #{tpu_custom_call.1} parent=1 // pred_region
      _
    $region5: #{tpu_custom_call.1} parent=1 // pred_fallthru
      _
    // Predicated region
    $region6: #{tpu_custom_call.1} parent=1 // pred_check
      _
    $region7: #{tpu_custom_call.1} parent=1 // pred_check_branch
      %16 = sbr.rel (0) target = $region9
    $region8: #{tpu_custom_call.1} parent=1 // pred_region
      _
    $region9: #{tpu_custom_call.1} parent=1 // pred_fallthru
      _
    // Predicated region
    $region10: #{tpu_custom_call.1} parent=1 // pred_check
      _
    $region11: #{tpu_custom_call.1} parent=1 // pred_check_branch
      %18 = sbr.rel (0) target = $region13
    $region12: #{tpu_custom_call.1} parent=1 // pred_region
      _
    $region13: #{tpu_custom_call.1} parent=1 // pred_fallthru
      _
    // Predicated region
    $region14: #{tpu_custom_call.1} parent=1 // pred_check
      _
    $region15: #{tpu_custom_call.1} parent=1 // pred_check_branch
      %20 = sbr.rel (0) target = $region17
    $region16: #{tpu_custom_call.1} parent=1 // pred_region
      _
    $region17: #{tpu_custom_call.1} parent=1 // pred_fallthru
      _
    // Predicated region
    $region18: #{tpu_custom_call.1} parent=1 // pred_check
      _
    $region19: #{tpu_custom_call.1} parent=1 // pred_check_branch
      %22 = sbr.rel (0) target = $region21
    $region20: #{tpu_custom_call.1} parent=1 // pred_region
      _
    $region21: #{tpu_custom_call.1} parent=1 // pred_fallthru
      _
    %v23 = vld [vmem:[%s0] sm:$0x1]
    %v24 = vld [vmem:[%s1] sm:$0xff]
    %v25 = vld [vmem:[%s1 + $0x8] sm:$0xff]
    %v26 = vld [vmem:[%s1 + $0x10] sm:$0xff]
    %v27 = vld [vmem:[%s1 + $0x18] sm:$0xff]
    %vm28 = vcmask 261120
    %v30 = vsel %vm28, %v23, 0
    %32 = vmatprep.subr.mxu0 0.0
    %33 = vmatpush1.msra.mxu0 %v24
    %34 = vmatprep.subr.mxu0 0.0
    %35 = vmatpush1.msra.mxu0 %v25
    %36 = vmatprep.subr.mxu0 0.0
    %37 = vmatpush1.msra.mxu0 %v26
    %38 = vmatprep.subr.mxu0 0.0
    %39 = vmatpush1.msra.mxu0 %v27
    %40 = vmatprep.subr.mxu0 0.0
    %41 = vmatpush1.msra.mxu0 0.0
    %42 = vmatprep.subr.mxu0 0.0
    %43 = vmatpush1.msra.mxu0 0.0
    %44 = vmatprep.subr.mxu0 0.0
    %45 = vmatpush1.msra.mxu0 0.0
    %46 = vmatprep.subr.mxu0 0.0
    %47 = vmatpush1.msra.mxu0 0.0
    %48 = vmatprep.subr.mxu0 0.0
    %49 = vmatpush1.msra.mxu0 0.0
    %50 = vmatprep.subr.mxu0 0.0
    %51 = vmatpush1.msra.mxu0 0.0
    %52 = vmatprep.subr.mxu0 0.0
    %53 = vmatpush1.msra.mxu0 0.0
    %54 = vmatprep.subr.mxu0 0.0
    %55 = vmatpush1.msra.mxu0 0.0
    %56 = vmatprep.subr.mxu0 0.0
    %57 = vmatpush1.msra.mxu0 0.0
    %58 = vmatprep.subr.mxu0 0.0
    %59 = vmatpush1.msra.mxu0 0.0
    %60 = vmatprep.subr.mxu0 0.0
    %61 = vmatpush1.msra.mxu0 0.0
    %62 = vmatprep.subr.mxu0 0.0
    %63 = vmatpush1.msra.mxu0 0.0
    %64 = vmatprep.subr.mxu0 0.0
    %65 = vmatpush1.msra.mxu0 0.0
    %66 = vmatprep.subr.mxu0 0.0
    %67 = vmatpush1.msra.mxu0 0.0
    %68 = vmatprep.subr.mxu0 0.0
    %69 = vmatpush1.msra.mxu0 0.0
    %70 = vmatprep.subr.mxu0 0.0
    %71 = vmatpush1.msra.mxu0 0.0
    %72 = vmatprep.subr.mxu0 0.0
    %73 = vmatpush1.msra.mxu0 0.0
    %74 = vmatprep.subr.mxu0 0.0
    %75 = vmatpush1.msra.mxu0 0.0
    %76 = vmatprep.subr.mxu0 0.0
    %77 = vmatpush1.msra.mxu0 0.0
    %78 = vmatprep.subr.mxu0 0.0
    %79 = vmatpush1.msra.mxu0 0.0
    %80 = vmatprep.subr.mxu0 0.0
    %81 = vmatpush1.msra.mxu0 0.0
    %82 = vmatprep.subr.mxu0 0.0
    %83 = vmatpush1.msra.mxu0 0.0
    %84 = vmatprep.subr.mxu0 0.0
    %85 = vmatpush1.msra.mxu0 0.0
    %86 = vmatprep.subr.mxu0 0.0
    %87 = vmatpush1.msra.mxu0 0.0
    %88 = vmatprep.subr.mxu0 0.0
    %89 = vmatpush1.msra.mxu0 0.0
    %90 = vmatprep.subr.mxu0 0.0
    %91 = vmatpush1.msra.mxu0 0.0
    %92 = vmatprep.subr.mxu0 0.0
    %93 = vmatpush1.msra.mxu0 0.0
    %94 = vmatprep.subr.mxu0 0.0
    %95 = vmatpush1.msra.mxu0 0.0
    %96 = vmatprep.mubr.f32.mxu0 0.0
    %97 = vmatmul.mubr.f32.gmra.mrb[0].mxu0 %v30
    %v98 = vpop.f32.mrb[0].mxu0
    %v99 = vadd.f32 0.0, %v98
    %v100 = vpop.f32.mrb[0].mxu0
    %101 = vdwg.mxu0
    %v102 = vmul.f32 %v23, %v23
    %vm103 = vcmask 253952
    %v104 = vsel %vm103, %v102, 0.0
    %105 = vadd.xlane.f32.xlu0 %v104
    %v106 = vpop.xlane.xlu0 %105
    %v107 = vsel %vm103, %v23, 0.0
    %108 = vadd.xlane.f32.xlu0 %v107
    %v109 = vpop.xlane.xlu0 %108
    %v110 = vmul.f32 %v109, 2e-06
    %v111 = vadd.f32 %v106, %v110
    %v112 = vmul.f32 %v99, 2.0
    %v113 = vsub.f32 %v111, %v112
    %v114 = vld [vmem:[%s2] sm:$0x1]
    %v115 = vadd.f32 %v113, %v114
    %v116 = vmax.f32 %v115, 0.0
    %v117 = vrsqrt.pop %v116
    %v118 = vmul.f32 %v116, %v117
    %vm119 = vcmp.eq.f32.partialorder %v116, inf
    %v120 = vsel %vm119, %v116, %v118
    %vm121 = vcmp.eq.f32.partialorder %v116, 0.0
    %v122 = vand.u32 %v116, 2147483648
    %v123 = vsel %vm121, %v122, %v120
    %v124 = vld [vmem:[%s3] sm:$0x1]
    %v125 = vmul.f32 %v123, %v124
    %vm126 = vcmask 65536
    %v127 = vsel %vm126, %v125, 0.0
    %128 = vadd.xlane.f32.xlu0 %v127
    %v129 = vpop.xlane.xlu0 %128
    %v130 = vld [vmem:[#allocation2] sm:$0x1]
    %v131 = vsub.f32 6.8, %v129
    %v132 = vmax.f32 %v131, 0.0
    %v133 = vsub.f32 1.0, %v130
    %v134 = vmul.f32 %v133, %v129
    %v135 = vmul.f32 %v134, %v129
    %v136 = vmul.f32 %v130, %v132
    %v137 = vmul.f32 %v136, %v132
    %v138 = vadd.f32 %v135, %v137
    %v139 = vmul.f32 %v138, 0.5
    %vm140 = vcmask 0
    %141 = vst.msk [vmem:[#allocation3] sm:$0x1] %vm140, %v139
    // Predicated region
    $region22: #{tpu_custom_call.1} parent=1 // pred_check
      _
    $region23: #{tpu_custom_call.1} parent=1 // pred_check_branch
      %143 = sbr.rel (0) target = $region25
    $region24: #{tpu_custom_call.1} parent=1 // pred_region
      %s145 = ssub.s32 16, 16
      %146 = vsyncadd [#allocation4], %s145
      %s148 = sshll.u32 [#allocation3], 4
      %s149 = int_to_ptr.vmem [resolvable:$true] %s148
      %151 = dma.vmem_to_hbm [thread:$0]  %s149, 16, %s5, [#allocation4]
    $region25: #{tpu_custom_call.1} parent=1 // pred_fallthru
      _
    // Predicated region
    $region26: #{tpu_custom_call.1} parent=1 // pred_check
      _
    $region27: #{tpu_custom_call.1} parent=1 // pred_check_branch
      %153 = sbr.rel (0) target = $region29
    $region28: #{tpu_custom_call.1} parent=1 // pred_region
      %154 = dma.done [#allocation4], 16
    $region29: #{tpu_custom_call.1} parent=1 // pred_fallthru
      _
    %155 = vsyncpa [#allocation4], 1

</llo_original>
